<compile_context>
chip_gen: v5e
topology: v5e:2x2
jax: 0.10.0
libtpu: 0.0.40
codegen_flags: <defaults>
</compile_context>

<pallas_src>
import numpy as np
import jax
import jax.numpy as jnp
from jax import lax
from jax.experimental import pallas as pl
from jax.experimental.pallas import tpu as pltpu

N_NODES = 16      # nodes in the synthetic graph
EMB_DIM = 32      # emb.shape[1] (synthetic "Codebert" embedding dim)
RAND_DIM = 8      # _RANDFEAT dim (interpolated up to EMB_DIM)
FUNC_DIM = 12     # _FUNC_EMB dim (interpolated up to EMB_DIM)
HIDDEN = 32       # hidden_feats
HEADS = 4         # num_heads of gat1
V1_LEN = 6        # len(v1)
NEG_SLOPE = 0.2   # DGL GATConv leaky_relu default

SLAB_W = 128      # parameter-slab lane width (one 128-lane tile)


# ------------------------- parameter-slab layout ---------------------------

def _build_layout():
    D, F, H, N = EMB_DIM, HIDDEN, HEADS, N_NODES
    entries = [
        ("W0", 3 * D, D), ("b0", 1, D), ("W1", D, H * F),
        ("AR", H * N, H * F), ("AL", H * N, H * F), ("W2BD", H * F, H * F),
        ("b1w2", 1, F), ("ar2", 1, F), ("al2", 1, F), ("b2", 1, F),
        ("wna", 1, F), ("bna", 1, 1),
        ("Wn1", F, F), ("bn1", 1, F), ("Wn2", F, SLAB_W), ("bn2", 1, SLAB_W),
        ("Wg1", F, F), ("bg1", 1, F), ("Wg2", F, SLAB_W), ("bg2", 1, SLAB_W),
    ]
    offs, r = {}, 0
    for name, rows, cols in entries:
        offs[name] = (r, rows, cols)
        r += ((rows + 7) // 8) * 8        # keep every block 8-row aligned
    return offs, r


_OFFS, SLAB_ROWS = _build_layout()


# --------------------------------- kernel ----------------------------------

def multitask_gat_kernel(cat_ref, adjs_ref, slab_ref, out_ref):
    f32 = jnp.float32
    NEG = jnp.float32(-1e30)
    N, F, H = N_NODES, HIDDEN, HEADS

    def P(name):
        r0, rows, cols = _OFFS[name]
        return slab_ref[r0:r0 + rows, 0:cols]

    adjs = adjs_ref[...]                                   # (H*N, N) stacked adjacency

    # ---- input projection: h = Linear(3*D -> D)(concat features) ----
    h = jnp.dot(cat_ref[...], P("W0"), preferred_element_type=f32) + P("b0")   # (N, D)

    # ---- GAT layer 1: all heads vectorized along sublanes ----
    feat1 = jnp.dot(h, P("W1"), preferred_element_type=f32)                    # (N, H*F)
    feat_t = jnp.concatenate([feat1] * H, axis=0)                              # (H*N, H*F)

    # dst-side score er[d,h] (VPU multiply + lane reduce, no MXU launch)
    er = jnp.sum(P("AR") * feat_t, axis=-1, keepdims=True)                     # (H*N, 1)
    # src-side score el[s,h], broadcast over dst rows inside each head block
    el = lax.dot_general(P("AL"), feat1, (((1,), (1,)), ((), ())),
                         preferred_element_type=f32)                           # (H*N, N)

    e = er + el                                                                # e[h*N+d, s]
    e = jnp.where(e >= 0, e, NEG_SLOPE * e)
    e = jnp.where(adjs > 0, e, NEG)
    m = jnp.max(e, axis=-1, keepdims=True)
    p = jnp.exp(e - m)
    alpha = p * pl.reciprocal(jnp.sum(p, axis=-1, keepdims=True), approx=False)  # (H*N, N)

    # per-head projection to gat2 input via lane-block-diag W2, then aggregate
    g_wide = jnp.dot(feat1, P("W2BD"), preferred_element_type=f32)             # (N, H*F)
    z = jnp.dot(alpha, g_wide, preferred_element_type=f32)                     # (H*N, H*F)
    feat2 = P("b1w2")                                                          # b1 @ W2 (hoisted)
    for hh in range(H):
        feat2 = feat2 + z[hh * N:(hh + 1) * N, hh * F:(hh + 1) * F]            # (N, F)

    # ---- GAT layer 2 (single head) ----
    adj = adjs[0:N, :]
    er2 = jnp.sum(feat2 * P("ar2"), axis=-1, keepdims=True)                    # (N, 1)
    el2 = lax.dot_general(P("al2"), feat2, (((1,), (1,)), ((), ())),
                          preferred_element_type=f32)                          # (1, N)
    e2 = er2 + el2
    e2 = jnp.where(e2 >= 0, e2, NEG_SLOPE * e2)
    e2 = jnp.where(adj > 0, e2, NEG)
    m2 = jnp.max(e2, axis=-1, keepdims=True)
    p2 = jnp.exp(e2 - m2)
    alpha2 = p2 * pl.reciprocal(jnp.sum(p2, axis=-1, keepdims=True), approx=False)
    h2 = jnp.dot(alpha2, feat2, preferred_element_type=f32) + P("b2")          # (N, F)

    # ---- attention pooling over nodes ----
    aw_logit = jnp.sum(h2 * P("wna"), axis=-1, keepdims=True) + P("bna")       # (N, 1)
    aw = pl.reciprocal(1.0 + jnp.exp(-aw_logit), approx=False)                 # sigmoid
    hg = jnp.sum(h2 * aw, axis=0, keepdims=True)                               # (1, F)

    # ---- node MLP (dropout is identity at inference; 1/T folded in glue) ----
    nh = jnp.maximum(jnp.dot(h2, P("Wn1"), preferred_element_type=f32) + P("bn1"), 0.0)
    node_pad = jnp.dot(nh, P("Wn2"), preferred_element_type=f32) + P("bn2")    # (N, 128)
    out_ref[0:N, :] = node_pad

    # ---- graph MLP (8 identical rows so the store stays tile-aligned) ----
    hg8 = jnp.broadcast_to(hg, (8, F))
    gh = jnp.maximum(jnp.dot(hg8, P("Wg1"), preferred_element_type=f32) + P("bg1"), 0.0)
    graph_pad = jnp.dot(gh, P("Wg2"), preferred_element_type=f32) + P("bg2")   # (8, 128)
    out_ref[N:N + 8, :] = graph_pad


# ----------------------------- plain-JAX glue ------------------------------

def interp_nearest(x, out_size):
    """F.interpolate(x.unsqueeze(0), size=out_size, mode='nearest').squeeze(0)."""
    d = x.shape[1]
    idx = np.minimum((np.arange(out_size) * d) // out_size, d - 1)
    return x[:, idx]


def head_block(att):
    """(H, F) per-head attention vector -> (H, H*F) head-block-diagonal matrix."""
    H_, F_ = att.shape
    out = jnp.zeros((H_, H_ * F_), att.dtype)
    for hh in range(H_):
        out = out.at[hh, hh * F_:(hh + 1) * F_].set(att[hh])
    return out


def _pack_slab(params):
    """Pack all (possibly pre-transformed) parameters into one (SLAB_ROWS, 128) slab."""
    D, F, H, N = EMB_DIM, HIDDEN, HEADS, N_NODES
    inv_t = 1.0 / params["temperature"][0, 0]

    ar1b = head_block(params["attn_r1"])                    # (H, H*F)
    al1b = head_block(params["attn_l1"])
    AR = jnp.repeat(ar1b, N, axis=0)                        # (H*N, H*F)
    AL = jnp.repeat(al1b, N, axis=0)

    W2 = params["W2"]                                       # (H*F, F)
    W2BD = jnp.zeros((H * F, H * F), jnp.float32)
    for hh in range(H):
        W2BD = W2BD.at[hh * F:(hh + 1) * F, hh * F:(hh + 1) * F].set(
            W2[hh * F:(hh + 1) * F, :])
    b1w2 = params["b1"] @ W2                                # (1, F)

    Wn2 = jnp.zeros((F, SLAB_W), jnp.float32).at[:, :2].set(params["Wn2"] * inv_t)
    bn2 = jnp.zeros((1, SLAB_W), jnp.float32).at[:, :2].set(params["bn2"] * inv_t)
    Wg2 = jnp.zeros((F, SLAB_W), jnp.float32).at[:, :2].set(params["Wg2"] * inv_t)
    bg2 = jnp.zeros((1, SLAB_W), jnp.float32).at[:, :2].set(params["bg2"] * inv_t)

    tensors = {
        "W0": params["W0"], "b0": params["b0"], "W1": params["W1"],
        "AR": AR, "AL": AL, "W2BD": W2BD, "b1w2": b1w2,
        "ar2": params["attn_r2"], "al2": params["attn_l2"], "b2": params["b2"],
        "wna": params["Wna"].T, "bna": params["bna"],
        "Wn1": params["Wn1"], "bn1": params["bn1"], "Wn2": Wn2, "bn2": bn2,
        "Wg1": params["Wg1"], "bg1": params["bg1"], "Wg2": Wg2, "bg2": bg2,
    }

    slab = jnp.zeros((SLAB_ROWS, SLAB_W), jnp.float32)
    for name, (r0, rows, cols) in _OFFS.items():
        t = tensors[name].astype(jnp.float32)
        assert t.shape == (rows, cols), (name, t.shape, (rows, cols))
        slab = slab.at[r0:r0 + rows, 0:cols].set(t)
    return slab


def init_params(key):
    D, F, H, V = EMB_DIM, HIDDEN, HEADS, V1_LEN

    def nrm(k, shape, scale=0.1):
        return jax.random.normal(k, shape, jnp.float32) * scale

    ks = jax.random.split(key, 24)
    return dict(
        # nn.Linear(3*D, D) created inside forward in PyTorch (deterministic init here)
        W0=nrm(ks[0], (3 * D, D)), b0=nrm(ks[1], (1, D)),
        # gat1
        W1=nrm(ks[2], (D, H * F)), attn_l1=nrm(ks[3], (H, F)), attn_r1=nrm(ks[4], (H, F)),
        b1=nrm(ks[5], (1, H * F)),
        # gat2
        W2=nrm(ks[6], (H * F, F)), attn_l2=nrm(ks[7], (1, F)), attn_r2=nrm(ks[8], (1, F)),
        b2=nrm(ks[9], (1, F)),
        # node_attn
        Wna=nrm(ks[10], (F, 1)), bna=nrm(ks[11], (1, 1)),
        # node_mlp
        Wn1=nrm(ks[12], (F, F)), bn1=nrm(ks[13], (1, F)),
        Wn2=nrm(ks[14], (F, 2)), bn2=nrm(ks[15], (1, 2)),
        # graph_mlp
        Wg1=nrm(ks[16], (F, F)), bg1=nrm(ks[17], (1, F)),
        Wg2=nrm(ks[18], (F, 2)), bg2=nrm(ks[19], (1, 2)),
        # beta_mlp
        Wb1=nrm(ks[20], (V, 16)), bb1=nrm(ks[21], (1, 16)),
        Wb2=nrm(ks[22], (16, 1)), bb2=nrm(ks[23], (1, 1)),
        v1=(jnp.arange(V, dtype=jnp.float32) * 0.1 - 0.2).reshape(1, V),
        temperature=jnp.ones((1, 1), jnp.float32),
    )


def multitask_gat_forward(params, rand_feat, func_emb, emb, adj):
    D = emb.shape[1]
    N = emb.shape[0]
    assert N == N_NODES and D == EMB_DIM

    cat = jnp.concatenate(
        [interp_nearest(rand_feat, D), interp_nearest(func_emb, D), emb], axis=1
    ).astype(jnp.float32)                                               # (N, 3D)
    adj_stack = jnp.concatenate([adj.astype(jnp.float32)] * HEADS, axis=0)   # (H*N, N)
    slab = _pack_slab(params)                                           # (SLAB_ROWS, 128)

    vmem = pl.BlockSpec(memory_space=pltpu.MemorySpace.VMEM)
    out = pl.pallas_call(
        multitask_gat_kernel,
        out_shape=jax.ShapeDtypeStruct((N + 8, SLAB_W), jnp.float32),
        in_specs=[vmem, vmem, vmem],
        out_specs=vmem,
    )(cat, adj_stack, slab)

    node_logits = out[:N, :2]
    graph_logits = out[N, :2]

    # TODO(synk): beta only modulates feat_drop/attn_drop probabilities; dropout is
    # identity in this eval-mode forward, so beta is a pure parameter-only diagnostic
    # and is computed in plain JAX outside the kernel.
    hb = jnp.maximum(params["v1"] @ params["Wb1"] + params["bb1"], 0.0)
    beta = jax.nn.sigmoid(hb @ params["Wb2"] + params["bb2"])[0, 0]
    return node_logits, graph_logits, beta


multitask_gat_forward_jit = jax.jit(multitask_gat_forward)


# ------------------------- pure-JAX reference check ------------------------

def reference_forward(params, rand_feat, func_emb, emb, adj):
    D = emb.shape[1]
    cat = jnp.concatenate(
        [interp_nearest(rand_feat, D), interp_nearest(func_emb, D), emb], axis=1)
    h = cat @ params["W0"] + params["b0"]
    N, F, H = h.shape[0], HIDDEN, HEADS

    feat = (h @ params["W1"]).reshape(N, H, F)
    el = jnp.einsum("nhf,hf->nh", feat, params["attn_l1"])
    er = jnp.einsum("nhf,hf->nh", feat, params["attn_r1"])
    e = er[:, None, :] + el[None, :, :]                     # [dst, src, head]
    e = jnp.where(e >= 0, e, NEG_SLOPE * e)
    e = jnp.where(adj[:, :, None] > 0, e, -1e30)
    a = jax.nn.softmax(e, axis=1)
    h1 = (jnp.einsum("dsh,shf->dhf", a, feat)
          + params["b1"].reshape(1, H, F)).reshape(N, H * F)

    feat2 = h1 @ params["W2"]
    el2 = feat2 @ params["attn_l2"][0]
    er2 = feat2 @ params["attn_r2"][0]
    e2 = er2[:, None] + el2[None, :]
    e2 = jnp.where(e2 >= 0, e2, NEG_SLOPE * e2)
    e2 = jnp.where(adj > 0, e2, -1e30)
    a2 = jax.nn.softmax(e2, axis=1)
    h2 = a2 @ feat2 + params["b2"]

    aw = jax.nn.sigmoid(h2 @ params["Wna"] + params["bna"])
    hg = jnp.sum(h2 * aw, axis=0)
    t = params["temperature"][0, 0]
    node_logits = (jnp.maximum(h2 @ params["Wn1"] + params["bn1"], 0)
                   @ params["Wn2"] + params["bn2"]) / t
    graph_logits = (jnp.maximum(hg @ params["Wg1"] + params["bg1"][0], 0)
                    @ params["Wg2"] + params["bg2"][0]) / t
    hb = jnp.maximum(params["v1"] @ params["Wb1"] + params["bb1"], 0)
    beta = jax.nn.sigmoid(hb @ params["Wb2"] + params["bb2"])[0, 0]
    return node_logits, graph_logits, beta


if __name__ == "__main__":
    key = jax.random.PRNGKey(0)
    kp, k1, k2, k3 = jax.random.split(key, 4)
    params = init_params(kp)

    rand_feat = jax.random.normal(k1, (N_NODES, RAND_DIM), jnp.float32)
    func_emb = jax.random.normal(k2, (N_NODES, FUNC_DIM), jnp.float32)
    emb = jax.random.normal(k3, (N_NODES, EMB_DIM), jnp.float32)

    # deterministic synthetic graph: bidirectional ring + self-loops; adj[dst, src]
    adj_np = np.eye(N_NODES, dtype=np.float32)
    for i in range(N_NODES):
        adj_np[(i + 1) % N_NODES, i] = 1.0
        adj_np[i, (i + 1) % N_NODES] = 1.0
    adj = jnp.asarray(adj_np)

    node_logits, graph_logits, beta = multitask_gat_forward_jit(
        params, rand_feat, func_emb, emb, adj)
    jax.block_until_ready((node_logits, graph_logits, beta))

    ref_node, ref_graph, ref_beta = reference_forward(
        params, rand_feat, func_emb, emb, adj)
    assert node_logits.shape == (N_NODES, 2) and graph_logits.shape == (2,)
    assert np.allclose(np.asarray(node_logits), np.asarray(ref_node), atol=1e-3, rtol=1e-3)
    assert np.allclose(np.asarray(graph_logits), np.asarray(ref_graph), atol=1e-3, rtol=1e-3)
    assert np.allclose(float(beta), float(ref_beta), atol=1e-4)
    print("KERNEL_OK")
</pallas_src>

<mosaic_0001>
module attributes {stable_mosaic.version = 11 : i64} {
  func.func @multitask_gat_kernel(%arg0: memref<16x96xf32, #tpu.memory_space<vmem>>, %arg1: memref<64x16xf32, #tpu.memory_space<vmem>>, %arg2: memref<600x128xf32, #tpu.memory_space<vmem>>, %arg3: memref<24x128xf32, #tpu.memory_space<vmem>>) attributes {dimension_semantics = [], scalar_prefetch = 0 : i64, scratch_operands = 0 : i64, tpu.core_type = #tpu.core_type<tc>} {
    %c0 = arith.constant 0 : index
    %c0_0 = arith.constant 0 : index
    %0 = vector.load %arg1[%c0, %c0_0] : memref<64x16xf32, #tpu.memory_space<vmem>>, vector<64x16xf32>
    %c0_1 = arith.constant 0 : index
    %c0_2 = arith.constant 0 : index
    %1 = vector.load %arg0[%c0_1, %c0_2] : memref<16x96xf32, #tpu.memory_space<vmem>>, vector<16x96xf32>
    %c0_3 = arith.constant 0 : index
    %c0_4 = arith.constant 0 : index
    %2 = vector.load %arg2[%c0_3, %c0_4] : memref<600x128xf32, #tpu.memory_space<vmem>>, vector<96x32xf32>
    %cst = arith.constant dense<0.000000e+00> : vector<16x32xf32>
    %3 = tpu.matmul %1, %2, %cst {dimension_numbers = #tpu.dot_dimension_numbers<[1], [0], [0], [1], [0, 0, 1, 1], [], []>} : vector<16x96xf32>, vector<96x32xf32>, vector<16x32xf32> -> vector<16x32xf32>
    %c96 = arith.constant 96 : index
    %c0_5 = arith.constant 0 : index
    %4 = vector.load %arg2[%c96, %c0_5] : memref<600x128xf32, #tpu.memory_space<vmem>>, vector<1x32xf32>
    %5 = vector.broadcast %4 : vector<1x32xf32> to vector<16x32xf32>
    %6 = arith.addf %3, %5 : vector<16x32xf32>
    %c104 = arith.constant 104 : index
    %c0_6 = arith.constant 0 : index
    %7 = vector.load %arg2[%c104, %c0_6] : memref<600x128xf32, #tpu.memory_space<vmem>>, vector<32x128xf32>
    %cst_7 = arith.constant dense<0.000000e+00> : vector<16x128xf32>
    %8 = tpu.matmul %6, %7, %cst_7 {dimension_numbers = #tpu.dot_dimension_numbers<[1], [0], [0], [1], [0, 0, 1, 1], [], []>} : vector<16x32xf32>, vector<32x128xf32>, vector<16x128xf32> -> vector<16x128xf32>
    %9 = tpu.concatenate %8, %8, %8, %8 in 0 : vector<16x128xf32>, vector<16x128xf32>, vector<16x128xf32>, vector<16x128xf32> -> vector<64x128xf32>
    %c136 = arith.constant 136 : index
    %c0_8 = arith.constant 0 : index
    %10 = vector.load %arg2[%c136, %c0_8] : memref<600x128xf32, #tpu.memory_space<vmem>>, vector<64x128xf32>
    %11 = arith.mulf %10, %9 : vector<64x128xf32>
    %cst_9 = arith.constant dense<0.000000e+00> : vector<64xf32>
    %12 = vector.multi_reduction <add>, %11, %cst_9 [1] : vector<64x128xf32> to vector<64xf32>
    %13 = vector.shape_cast %12 : vector<64xf32> to vector<64x1xf32>
    %c200 = arith.constant 200 : index
    %c0_10 = arith.constant 0 : index
    %14 = vector.load %arg2[%c200, %c0_10] : memref<600x128xf32, #tpu.memory_space<vmem>>, vector<64x128xf32>
    %cst_11 = arith.constant dense<0.000000e+00> : vector<64x16xf32>
    %15 = tpu.matmul %14, %8, %cst_11 {dimension_numbers = #tpu.dot_dimension_numbers<[1], [1], [0], [0], [0, 0, 1, 0], [], []>} : vector<64x128xf32>, vector<16x128xf32>, vector<64x16xf32> -> vector<64x16xf32>
    %16 = vector.broadcast %13 : vector<64x1xf32> to vector<64x16xf32>
    %17 = arith.addf %16, %15 : vector<64x16xf32>
    %cst_12 = arith.constant 0.000000e+00 : f32
    %18 = vector.broadcast %cst_12 : f32 to vector<64x16xf32>
    %19 = arith.cmpf oge, %17, %18 : vector<64x16xf32>
    %cst_13 = arith.constant 2.000000e-01 : f32
    %20 = vector.broadcast %cst_13 : f32 to vector<64x16xf32>
    %21 = arith.mulf %20, %17 : vector<64x16xf32>
    %22 = arith.select %19, %17, %21 : vector<64x16xi1>, vector<64x16xf32>
    %cst_14 = arith.constant 0.000000e+00 : f32
    %23 = vector.broadcast %cst_14 : f32 to vector<64x16xf32>
    %24 = arith.cmpf ogt, %0, %23 : vector<64x16xf32>
    %cst_15 = arith.constant -1.000000e+30 : f32
    %25 = vector.broadcast %cst_15 : f32 to vector<64x16xf32>
    %26 = arith.select %24, %22, %25 : vector<64x16xi1>, vector<64x16xf32>
    %cst_16 = arith.constant dense<0xFF800000> : vector<64xf32>
    %27 = vector.multi_reduction <maximumf>, %26, %cst_16 [1] : vector<64x16xf32> to vector<64xf32>
    %28 = vector.shape_cast %27 : vector<64xf32> to vector<64x1xf32>
    %29 = vector.broadcast %28 : vector<64x1xf32> to vector<64x16xf32>
    %30 = arith.subf %26, %29 : vector<64x16xf32>
    %31 = math.exp %30 : vector<64x16xf32>
    %cst_17 = arith.constant dense<0.000000e+00> : vector<64xf32>
    %32 = vector.multi_reduction <add>, %31, %cst_17 [1] : vector<64x16xf32> to vector<64xf32>
    %33 = vector.shape_cast %32 : vector<64xf32> to vector<64x1xf32>
    %34 = tpu.reciprocal %33 : vector<64x1xf32> -> vector<64x1xf32>
    %35 = vector.broadcast %34 : vector<64x1xf32> to vector<64x16xf32>
    %36 = arith.mulf %31, %35 : vector<64x16xf32>
    %c264 = arith.constant 264 : index
    %c0_18 = arith.constant 0 : index
    %37 = vector.load %arg2[%c264, %c0_18] : memref<600x128xf32, #tpu.memory_space<vmem>>, vector<128x128xf32>
    %cst_19 = arith.constant dense<0.000000e+00> : vector<16x128xf32>
    %38 = tpu.matmul %8, %37, %cst_19 {dimension_numbers = #tpu.dot_dimension_numbers<[1], [0], [0], [1], [0, 0, 1, 1], [], []>} : vector<16x128xf32>, vector<128x128xf32>, vector<16x128xf32> -> vector<16x128xf32>
    %cst_20 = arith.constant dense<0.000000e+00> : vector<64x128xf32>
    %39 = tpu.matmul %36, %38, %cst_20 {dimension_numbers = #tpu.dot_dimension_numbers<[1], [0], [0], [1], [0, 0, 1, 1], [], []>} : vector<64x16xf32>, vector<16x128xf32>, vector<64x128xf32> -> vector<64x128xf32>
    %c392 = arith.constant 392 : index
    %c0_21 = arith.constant 0 : index
    %40 = vector.load %arg2[%c392, %c0_21] : memref<600x128xf32, #tpu.memory_space<vmem>>, vector<1x32xf32>
    %41 = vector.extract_strided_slice %39 {offsets = [0, 0], sizes = [16, 32], strides = [1, 1]} : vector<64x128xf32> to vector<16x32xf32>
    %42 = vector.broadcast %40 : vector<1x32xf32> to vector<16x32xf32>
    %43 = arith.addf %42, %41 : vector<16x32xf32>
    %44 = vector.extract_strided_slice %39 {offsets = [16, 32], sizes = [16, 32], strides = [1, 1]} : vector<64x128xf32> to vector<16x32xf32>
    %45 = arith.addf %43, %44 : vector<16x32xf32>
    %46 = vector.extract_strided_slice %39 {offsets = [32, 64], sizes = [16, 32], strides = [1, 1]} : vector<64x128xf32> to vector<16x32xf32>
    %47 = arith.addf %45, %46 : vector<16x32xf32>
    %48 = vector.extract_strided_slice %39 {offsets = [48, 96], sizes = [16, 32], strides = [1, 1]} : vector<64x128xf32> to vector<16x32xf32>
    %49 = arith.addf %47, %48 : vector<16x32xf32>
    %50 = vector.extract_strided_slice %0 {offsets = [0, 0], sizes = [16, 16], strides = [1, 1]} : vector<64x16xf32> to vector<16x16xf32>
    %c400 = arith.constant 400 : index
    %c0_22 = arith.constant 0 : index
    %51 = vector.load %arg2[%c400, %c0_22] : memref<600x128xf32, #tpu.memory_space<vmem>>, vector<1x32xf32>
    %52 = vector.broadcast %51 : vector<1x32xf32> to vector<16x32xf32>
    %53 = arith.mulf %49, %52 : vector<16x32xf32>
    %cst_23 = arith.constant dense<0.000000e+00> : vector<16xf32>
    %54 = vector.multi_reduction <add>, %53, %cst_23 [1] : vector<16x32xf32> to vector<16xf32>
    %55 = vector.shape_cast %54 : vector<16xf32> to vector<16x1xf32>
    %c408 = arith.constant 408 : index
    %c0_24 = arith.constant 0 : index
    %56 = vector.load %arg2[%c408, %c0_24] : memref<600x128xf32, #tpu.memory_space<vmem>>, vector<1x32xf32>
    %cst_25 = arith.constant dense<0.000000e+00> : vector<1x16xf32>
    %57 = tpu.matmul %56, %49, %cst_25 {dimension_numbers = #tpu.dot_dimension_numbers<[1], [1], [0], [0], [0, 0, 1, 0], [], []>} : vector<1x32xf32>, vector<16x32xf32>, vector<1x16xf32> -> vector<1x16xf32>
    %58 = vector.broadcast %55 : vector<16x1xf32> to vector<16x16xf32>
    %59 = vector.broadcast %57 : vector<1x16xf32> to vector<16x16xf32>
    %60 = arith.addf %58, %59 : vector<16x16xf32>
    %cst_26 = arith.constant 0.000000e+00 : f32
    %61 = vector.broadcast %cst_26 : f32 to vector<16x16xf32>
    %62 = arith.cmpf oge, %60, %61 : vector<16x16xf32>
    %cst_27 = arith.constant 2.000000e-01 : f32
    %63 = vector.broadcast %cst_27 : f32 to vector<16x16xf32>
    %64 = arith.mulf %63, %60 : vector<16x16xf32>
    %65 = arith.select %62, %60, %64 : vector<16x16xi1>, vector<16x16xf32>
    %cst_28 = arith.constant 0.000000e+00 : f32
    %66 = vector.broadcast %cst_28 : f32 to vector<16x16xf32>
    %67 = arith.cmpf ogt, %50, %66 : vector<16x16xf32>
    %cst_29 = arith.constant -1.000000e+30 : f32
    %68 = vector.broadcast %cst_29 : f32 to vector<16x16xf32>
    %69 = arith.select %67, %65, %68 : vector<16x16xi1>, vector<16x16xf32>
    %cst_30 = arith.constant dense<0xFF800000> : vector<16xf32>
    %70 = vector.multi_reduction <maximumf>, %69, %cst_30 [1] : vector<16x16xf32> to vector<16xf32>
    %71 = vector.shape_cast %70 : vector<16xf32> to vector<16x1xf32>
    %72 = vector.broadcast %71 : vector<16x1xf32> to vector<16x16xf32>
    %73 = arith.subf %69, %72 : vector<16x16xf32>
    %74 = math.exp %73 : vector<16x16xf32>
    %cst_31 = arith.constant dense<0.000000e+00> : vector<16xf32>
    %75 = vector.multi_reduction <add>, %74, %cst_31 [1] : vector<16x16xf32> to vector<16xf32>
    %76 = vector.shape_cast %75 : vector<16xf32> to vector<16x1xf32>
    %77 = tpu.reciprocal %76 : vector<16x1xf32> -> vector<16x1xf32>
    %78 = vector.broadcast %77 : vector<16x1xf32> to vector<16x16xf32>
    %79 = arith.mulf %74, %78 : vector<16x16xf32>
    %cst_32 = arith.constant dense<0.000000e+00> : vector<16x32xf32>
    %80 = tpu.matmul %79, %49, %cst_32 {dimension_numbers = #tpu.dot_dimension_numbers<[1], [0], [0], [1], [0, 0, 1, 1], [], []>} : vector<16x16xf32>, vector<16x32xf32>, vector<16x32xf32> -> vector<16x32xf32>
    %c416 = arith.constant 416 : index
    %c0_33 = arith.constant 0 : index
    %81 = vector.load %arg2[%c416, %c0_33] : memref<600x128xf32, #tpu.memory_space<vmem>>, vector<1x32xf32>
    %82 = vector.broadcast %81 : vector<1x32xf32> to vector<16x32xf32>
    %83 = arith.addf %80, %82 : vector<16x32xf32>
    %c424 = arith.constant 424 : index
    %c0_34 = arith.constant 0 : index
    %84 = vector.load %arg2[%c424, %c0_34] : memref<600x128xf32, #tpu.memory_space<vmem>>, vector<1x32xf32>
    %85 = vector.broadcast %84 : vector<1x32xf32> to vector<16x32xf32>
    %86 = arith.mulf %83, %85 : vector<16x32xf32>
    %cst_35 = arith.constant dense<0.000000e+00> : vector<16xf32>
    %87 = vector.multi_reduction <add>, %86, %cst_35 [1] : vector<16x32xf32> to vector<16xf32>
    %88 = vector.shape_cast %87 : vector<16xf32> to vector<16x1xf32>
    %c432 = arith.constant 432 : index
    %c0_36 = arith.constant 0 : index
    %89 = vector.load %arg2[%c432, %c0_36] : memref<600x128xf32, #tpu.memory_space<vmem>>, vector<1x1xf32>
    %90 = vector.broadcast %89 : vector<1x1xf32> to vector<16x1xf32>
    %91 = arith.addf %88, %90 : vector<16x1xf32>
    %cst_37 = arith.constant 0.000000e+00 : f32
    %92 = vector.broadcast %cst_37 : f32 to vector<16x1xf32>
    %93 = arith.subf %92, %91 : vector<16x1xf32>
    %94 = math.exp %93 : vector<16x1xf32>
    %cst_38 = arith.constant 1.000000e+00 : f32
    %95 = vector.broadcast %cst_38 : f32 to vector<16x1xf32>
    %96 = arith.addf %95, %94 : vector<16x1xf32>
    %97 = tpu.reciprocal %96 : vector<16x1xf32> -> vector<16x1xf32>
    %98 = vector.broadcast %97 : vector<16x1xf32> to vector<16x32xf32>
    %99 = arith.mulf %83, %98 : vector<16x32xf32>
    %cst_39 = arith.constant dense<0.000000e+00> : vector<32xf32>
    %100 = vector.multi_reduction <add>, %99, %cst_39 [0] : vector<16x32xf32> to vector<32xf32>
    %101 = vector.shape_cast %100 : vector<32xf32> to vector<1x32xf32>
    %c440 = arith.constant 440 : index
    %c0_40 = arith.constant 0 : index
    %102 = vector.load %arg2[%c440, %c0_40] : memref<600x128xf32, #tpu.memory_space<vmem>>, vector<32x32xf32>
    %cst_41 = arith.constant dense<0.000000e+00> : vector<16x32xf32>
    %103 = tpu.matmul %83, %102, %cst_41 {dimension_numbers = #tpu.dot_dimension_numbers<[1], [0], [0], [1], [0, 0, 1, 1], [], []>} : vector<16x32xf32>, vector<32x32xf32>, vector<16x32xf32> -> vector<16x32xf32>
    %c472 = arith.constant 472 : index
    %c0_42 = arith.constant 0 : index
    %104 = vector.load %arg2[%c472, %c0_42] : memref<600x128xf32, #tpu.memory_space<vmem>>, vector<1x32xf32>
    %105 = vector.broadcast %104 : vector<1x32xf32> to vector<16x32xf32>
    %106 = arith.addf %103, %105 : vector<16x32xf32>
    %cst_43 = arith.constant 0.000000e+00 : f32
    %107 = vector.broadcast %cst_43 : f32 to vector<16x32xf32>
    %108 = arith.maximumf %106, %107 : vector<16x32xf32>
    %c480 = arith.constant 480 : index
    %c0_44 = arith.constant 0 : index
    %109 = vector.load %arg2[%c480, %c0_44] : memref<600x128xf32, #tpu.memory_space<vmem>>, vector<32x128xf32>
    %cst_45 = arith.constant dense<0.000000e+00> : vector<16x128xf32>
    %110 = tpu.matmul %108, %109, %cst_45 {dimension_numbers = #tpu.dot_dimension_numbers<[1], [0], [0], [1], [0, 0, 1, 1], [], []>} : vector<16x32xf32>, vector<32x128xf32>, vector<16x128xf32> -> vector<16x128xf32>
    %c512 = arith.constant 512 : index
    %c0_46 = arith.constant 0 : index
    %111 = vector.load %arg2[%c512, %c0_46] : memref<600x128xf32, #tpu.memory_space<vmem>>, vector<1x128xf32>
    %112 = vector.broadcast %111 : vector<1x128xf32> to vector<16x128xf32>
    %113 = arith.addf %110, %112 : vector<16x128xf32>
    %c0_47 = arith.constant 0 : index
    %c0_48 = arith.constant 0 : index
    %114 = vector.load %arg3[%c0_47, %c0_48] : memref<24x128xf32, #tpu.memory_space<vmem>>, vector<16x128xf32>
    tpu.vector_store %arg3[%c0_47, %c0_48], %113 {strides = array<i32>} : memref<24x128xf32, #tpu.memory_space<vmem>>, vector<16x128xf32>,
    %115 = vector.shape_cast %101 : vector<1x32xf32> to vector<1x32xf32>
    %116 = vector.broadcast %115 : vector<1x32xf32> to vector<8x32xf32>
    %c520 = arith.constant 520 : index
    %c0_49 = arith.constant 0 : index
    %117 = vector.load %arg2[%c520, %c0_49] : memref<600x128xf32, #tpu.memory_space<vmem>>, vector<32x32xf32>
    %cst_50 = arith.constant dense<0.000000e+00> : vector<8x32xf32>
    %118 = tpu.matmul %116, %117, %cst_50 {dimension_numbers = #tpu.dot_dimension_numbers<[1], [0], [0], [1], [0, 0, 1, 1], [], []>} : vector<8x32xf32>, vector<32x32xf32>, vector<8x32xf32> -> vector<8x32xf32>
    %c552 = arith.constant 552 : index
    %c0_51 = arith.constant 0 : index
    %119 = vector.load %arg2[%c552, %c0_51] : memref<600x128xf32, #tpu.memory_space<vmem>>, vector<1x32xf32>
    %120 = vector.broadcast %119 : vector<1x32xf32> to vector<8x32xf32>
    %121 = arith.addf %118, %120 : vector<8x32xf32>
    %cst_52 = arith.constant 0.000000e+00 : f32
    %122 = vector.broadcast %cst_52 : f32 to vector<8x32xf32>
    %123 = arith.maximumf %121, %122 : vector<8x32xf32>
    %c560 = arith.constant 560 : index
    %c0_53 = arith.constant 0 : index
    %124 = vector.load %arg2[%c560, %c0_53] : memref<600x128xf32, #tpu.memory_space<vmem>>, vector<32x128xf32>
    %cst_54 = arith.constant dense<0.000000e+00> : vector<8x128xf32>
    %125 = tpu.matmul %123, %124, %cst_54 {dimension_numbers = #tpu.dot_dimension_numbers<[1], [0], [0], [1], [0, 0, 1, 1], [], []>} : vector<8x32xf32>, vector<32x128xf32>, vector<8x128xf32> -> vector<8x128xf32>
    %c592 = arith.constant 592 : index
    %c0_55 = arith.constant 0 : index
    %126 = vector.load %arg2[%c592, %c0_55] : memref<600x128xf32, #tpu.memory_space<vmem>>, vector<1x128xf32>
    %127 = vector.broadcast %126 : vector<1x128xf32> to vector<8x128xf32>
    %128 = arith.addf %125, %127 : vector<8x128xf32>
    %c16 = arith.constant 16 : index
    %c0_56 = arith.constant 0 : index
    %129 = vector.load %arg3[%c16, %c0_56] : memref<24x128xf32, #tpu.memory_space<vmem>>, vector<8x128xf32>
    tpu.vector_store %arg3[%c16, %c0_56], %128 {strides = array<i32>} : memref<24x128xf32, #tpu.memory_space<vmem>>, vector<8x128xf32>,
    return
  }
}

</mosaic_0001>

<llo_original>
// kernel: multitask_gat_forward.1
$region0: #{multitask_gat_forward.1}
  #allocation0 [shape = 'u32[]', space=smem, size = 0x4, offset = 0x4, fixed_abs, tag = 'smem constant byte address 0x4 - core index']
  #allocation1 [shape = 'u32[72,128]{1,0:T(1,128)}', space=vmem, size = 0x9000, scoped, tag = 'internal scratch']
  %s0 = inlined_call_operand.vmem [shape: f32[16,96], index: 0, kind: input, shape index: {}]
  %s1 = inlined_call_operand.vmem [shape: f32[64,16], index: 1, kind: input, shape index: {}]
  %s2 = inlined_call_operand.vmem [shape: f32[600,128], index: 2, kind: input, shape index: {}]
  %s3 = inlined_call_operand.vmem [shape: f32[24,128], index: 3, kind: output, shape index: {}]
  %s4 = sld [smem:[#allocation0]]
  $region22: #{multitask_gat_forward.1} parent=0
    _
  %s6 = ssub.s32 1, %s4
  %s7 = scalar_select 0, %s6, %s4
  // Predicated region
  $region2: #{multitask_gat_forward.1} parent=0 // pred_check
    _
  $region3: #{multitask_gat_forward.1} parent=0 // pred_check_branch
    %9 = sbr.rel (0) target = $region5
  $region4: #{multitask_gat_forward.1} parent=0 // pred_region
    _
  $region5: #{multitask_gat_forward.1} parent=0 // pred_fallthru
    _
  // Predicated region
  $region6: #{multitask_gat_forward.1} parent=0 // pred_check
    _
  $region7: #{multitask_gat_forward.1} parent=0 // pred_check_branch
    %11 = sbr.rel (0) target = $region9
  $region8: #{multitask_gat_forward.1} parent=0 // pred_region
    _
  $region9: #{multitask_gat_forward.1} parent=0 // pred_fallthru
    _
  // Predicated region
  $region10: #{multitask_gat_forward.1} parent=0 // pred_check
    _
  $region11: #{multitask_gat_forward.1} parent=0 // pred_check_branch
    %13 = sbr.rel (0) target = $region13
  $region12: #{multitask_gat_forward.1} parent=0 // pred_region
    _
  $region13: #{multitask_gat_forward.1} parent=0 // pred_fallthru
    _
  %v14 = vld [vmem:[%s1] sm:$0xff]
  %v15 = vld [vmem:[%s1 + $0x8] sm:$0xff]
  %v16 = vld [vmem:[%s1 + $0x10] sm:$0xff]
  %v17 = vld [vmem:[%s1 + $0x18] sm:$0xff]
  %v18 = vld [vmem:[%s1 + $0x20] sm:$0xff]
  %v19 = vld [vmem:[%s1 + $0x28] sm:$0xff]
  %v20 = vld [vmem:[%s1 + $0x30] sm:$0xff]
  %v21 = vld [vmem:[%s1 + $0x38] sm:$0xff]
  %v22 = vld [vmem:[%s0] sm:$0xff]
  %v23 = vld [vmem:[%s0 + $0x8] sm:$0xff]
  %v24 = vld [vmem:[%s2] sm:$0xff]
  %v25 = vld [vmem:[%s2 + $0x8] sm:$0xff]
  %v26 = vld [vmem:[%s2 + $0x10] sm:$0xff]
  %v27 = vld [vmem:[%s2 + $0x18] sm:$0xff]
  %v28 = vld [vmem:[%s2 + $0x20] sm:$0xff]
  %v29 = vld [vmem:[%s2 + $0x28] sm:$0xff]
  %v30 = vld [vmem:[%s2 + $0x30] sm:$0xff]
  %v31 = vld [vmem:[%s2 + $0x38] sm:$0xff]
  %v32 = vld [vmem:[%s2 + $0x40] sm:$0xff]
  %v33 = vld [vmem:[%s2 + $0x48] sm:$0xff]
  %v34 = vld [vmem:[%s2 + $0x50] sm:$0xff]
  %v35 = vld [vmem:[%s2 + $0x58] sm:$0xff]
  %v36 = vld [vmem:[%s2 + $0x60] sm:$0x1]
  %v37 = vperm.slane %v36, 0
  %vm38 = vcmask 785408
  %v40 = vsel %vm38, %v22, 0
  %v43 = vsel %vm38, %v23, 0
  %45 = vmatpush.msra.mxu0 0.0
  %46 = vmatpush.msra.mxu0 0.0
  %47 = vmatpush.msra.mxu0 0.0
  %48 = vmatpush.msra.mxu0 0.0
  %49 = vmatpush.msra.mxu0 %v35
  %50 = vmatpush.msra.mxu0 %v34
  %51 = vmatpush.msra.mxu0 %v33
  %52 = vmatpush.msra.mxu0 %v32
  %53 = vmatpush.msra.mxu0 %v31
  %54 = vmatpush.msra.mxu0 %v30
  %55 = vmatpush.msra.mxu0 %v29
  %56 = vmatpush.msra.mxu0 %v28
  %57 = vmatpush.msra.mxu0 %v27
  %58 = vmatpush.msra.mxu0 %v26
  %59 = vmatpush.msra.mxu0 %v25
  %60 = vmatpush.msra.mxu0 %v24
  %61 = vmatmul.f32.gmra.mxu0 %v40
  %v62 = vpop.f32.mrf.mxu0
  %v63 = vadd.f32 %v37, %v62
  %64 = vmatmul.f32.gmra.mxu0 %v43
  %v65 = vpop.f32.mrf.mxu0
  %v66 = vadd.f32 %v37, %v65
  %67 = vdwg.mxu0
  %v68 = vld [vmem:[%s2 + $0x68] sm:$0xff]
  %v69 = vld [vmem:[%s2 + $0x70] sm:$0xff]
  %v70 = vld [vmem:[%s2 + $0x78] sm:$0xff]
  %v71 = vld [vmem:[%s2 + $0x80] sm:$0xff]
  %vm72 = vcmask 261120
  %v74 = vsel %vm72, %v63, 0
  %v77 = vsel %vm72, %v66, 0
  %79 = vmatpush.msra.mxu0 0.0
  %80 = vmatpush.msra.mxu0 0.0
  %81 = vmatpush.msra.mxu0 0.0
  %82 = vmatpush.msra.mxu0 0.0
  %83 = vmatpush.msra.mxu0 0.0
  %84 = vmatpush.msra.mxu0 0.0
  %85 = vmatpush.msra.mxu0 0.0
  %86 = vmatpush.msra.mxu0 0.0
  %87 = vmatpush.msra.mxu0 0.0
  %88 = vmatpush.msra.mxu0 0.0
  %89 = vmatpush.msra.mxu0 0.0
  %90 = vmatpush.msra.mxu0 0.0
  %91 = vmatpush.msra.mxu0 %v71
  %92 = vmatpush.msra.mxu0 %v70
  %93 = vmatpush.msra.mxu0 %v69
  %94 = vmatpush.msra.mxu0 %v68
  %95 = vmatmul.f32.gmra.mxu0 %v74
  %v96 = vpop.f32.mrf.mxu0
  %v97 = vadd.f32 0.0, %v96
  %98 = vmatmul.f32.gmra.mxu0 %v77
  %v99 = vpop.f32.mrf.mxu0
  %v100 = vadd.f32 0.0, %v99
  %101 = vdwg.mxu0
  %v102 = vld [vmem:[%s2 + $0x88] sm:$0xff]
  %v103 = vld [vmem:[%s2 + $0x90] sm:$0xff]
  %v104 = vld [vmem:[%s2 + $0x98] sm:$0xff]
  %v105 = vld [vmem:[%s2 + $0xa0] sm:$0xff]
  %v106 = vld [vmem:[%s2 + $0xa8] sm:$0xff]
  %v107 = vld [vmem:[%s2 + $0xb0] sm:$0xff]
  %v108 = vld [vmem:[%s2 + $0xb8] sm:$0xff]
  %v109 = vld [vmem:[%s2 + $0xc0] sm:$0xff]
  %v110 = vmul.f32 %v102, %v97
  %v111 = vmul.f32 %v103, %v100
  %v112 = vmul.f32 %v104, %v97
  %v113 = vmul.f32 %v105, %v100
  %v114 = vmul.f32 %v106, %v97
  %v115 = vmul.f32 %v107, %v100
  %v116 = vmul.f32 %v108, %v97
  %v117 = vmul.f32 %v109, %v100
  %118 = vadd.xlane.f32.xlu0 %v110
  %v119 = vpop.xlane.xlu0 %118
  %120 = vadd.xlane.f32.xlu0 %v111
  %v121 = vpop.xlane.xlu0 %120
  %122 = vadd.xlane.f32.xlu0 %v112
  %v123 = vpop.xlane.xlu0 %122
  %124 = vadd.xlane.f32.xlu0 %v113
  %v125 = vpop.xlane.xlu0 %124
  %126 = vadd.xlane.f32.xlu0 %v114
  %v127 = vpop.xlane.xlu0 %126
  %128 = vadd.xlane.f32.xlu0 %v115
  %v129 = vpop.xlane.xlu0 %128
  %130 = vadd.xlane.f32.xlu0 %v116
  %v131 = vpop.xlane.xlu0 %130
  %132 = vadd.xlane.f32.xlu0 %v117
  %v133 = vpop.xlane.xlu0 %132
  %v134 = vld [vmem:[%s2 + $0xc8] sm:$0xff]
  %v135 = vld [vmem:[%s2 + $0xd0] sm:$0xff]
  %v136 = vld [vmem:[%s2 + $0xd8] sm:$0xff]
  %v137 = vld [vmem:[%s2 + $0xe0] sm:$0xff]
  %v138 = vld [vmem:[%s2 + $0xe8] sm:$0xff]
  %v139 = vld [vmem:[%s2 + $0xf0] sm:$0xff]
  %v140 = vld [vmem:[%s2 + $0xf8] sm:$0xff]
  %v141 = vld [vmem:[%s2 + $0x100] sm:$0xff]
  %142 = vmatpush.xpose.msra.mxu0 0.0
  %143 = vmatpush.xpose.msra.mxu0 0.0
  %144 = vmatpush.xpose.msra.mxu0 0.0
  %145 = vmatpush.xpose.msra.mxu0 0.0
  %146 = vmatpush.xpose.msra.mxu0 0.0
  %147 = vmatpush.xpose.msra.mxu0 0.0
  %148 = vmatpush.xpose.msra.mxu0 0.0
  %149 = vmatpush.xpose.msra.mxu0 0.0
  %150 = vmatpush.xpose.msra.mxu0 0.0
  %151 = vmatpush.xpose.msra.mxu0 0.0
  %152 = vmatpush.xpose.msra.mxu0 0.0
  %153 = vmatpush.xpose.msra.mxu0 0.0
  %154 = vmatpush.xpose.msra.mxu0 0.0
  %155 = vmatpush.xpose.msra.mxu0 0.0
  %156 = vmatpush.xpose.msra.mxu0 %v100
  %157 = vmatpush.xpose.msra.mxu0 %v97
  %158 = vmatmul.f32.gmra.mxu0 %v134
  %v159 = vpop.f32.mrf.mxu0
  %v160 = vadd.f32 0.0, %v159
  %161 = vmatmul.f32.gmra.mxu0 %v135
  %v162 = vpop.f32.mrf.mxu0
  %v163 = vadd.f32 0.0, %v162
  %164 = vmatmul.f32.gmra.mxu0 %v136
  %v165 = vpop.f32.mrf.mxu0
  %v166 = vadd.f32 0.0, %v165
  %167 = vmatmul.f32.gmra.mxu0 %v137
  %v168 = vpop.f32.mrf.mxu0
  %v169 = vadd.f32 0.0, %v168
  %170 = vmatmul.f32.gmra.mxu0 %v138
  %v171 = vpop.f32.mrf.mxu0
  %v172 = vadd.f32 0.0, %v171
  %173 = vmatmul.f32.gmra.mxu0 %v139
  %v174 = vpop.f32.mrf.mxu0
  %v175 = vadd.f32 0.0, %v174
  %176 = vmatmul.f32.gmra.mxu0 %v140
  %v177 = vpop.f32.mrf.mxu0
  %v178 = vadd.f32 0.0, %v177
  %179 = vmatmul.f32.gmra.mxu0 %v141
  %v180 = vpop.f32.mrf.mxu0
  %v181 = vadd.f32 0.0, %v180
  %182 = vdwg.mxu0
  %v183 = vadd.f32 %v119, %v160
  %v184 = vadd.f32 %v121, %v163
  %v185 = vadd.f32 %v123, %v166
  %v186 = vadd.f32 %v125, %v169
  %v187 = vadd.f32 %v127, %v172
  %v188 = vadd.f32 %v129, %v175
  %v189 = vadd.f32 %v131, %v178
  %v190 = vadd.f32 %v133, %v181
  %vm191 = vcmp.ge.f32.partialorder %v183, 0.0
  %vm192 = vcmp.ge.f32.partialorder %v184, 0.0
  %vm193 = vcmp.ge.f32.partialorder %v185, 0.0
  %vm194 = vcmp.ge.f32.partialorder %v186, 0.0
  %vm195 = vcmp.ge.f32.partialorder %v187, 0.0
  %vm196 = vcmp.ge.f32.partialorder %v188, 0.0
  %vm197 = vcmp.ge.f32.partialorder %v189, 0.0
  %vm198 = vcmp.ge.f32.partialorder %v190, 0.0
  %v199 = vmul.f32 %v183, 0.2
  %v200 = vmul.f32 %v184, 0.2
  %v201 = vmul.f32 %v185, 0.2
  %v202 = vmul.f32 %v186, 0.2
  %v203 = vmul.f32 %v187, 0.2
  %v204 = vmul.f32 %v188, 0.2
  %v205 = vmul.f32 %v189, 0.2
  %v206 = vmul.f32 %v190, 0.2
  %v207 = vsel %vm191, %v183, %v199
  %v208 = vsel %vm192, %v184, %v200
  %v209 = vsel %vm193, %v185, %v201
  %v210 = vsel %vm194, %v186, %v202
  %v211 = vsel %vm195, %v187, %v203
  %v212 = vsel %vm196, %v188, %v204
  %v213 = vsel %vm197, %v189, %v205
  %v214 = vsel %vm198, %v190, %v206
  %vm215 = vcmp.gt.f32.partialorder %v14, 0.0
  %vm216 = vcmp.gt.f32.partialorder %v15, 0.0
  %vm217 = vcmp.gt.f32.partialorder %v16, 0.0
  %vm218 = vcmp.gt.f32.partialorder %v17, 0.0
  %vm219 = vcmp.gt.f32.partialorder %v18, 0.0
  %vm220 = vcmp.gt.f32.partialorder %v19, 0.0
  %vm221 = vcmp.gt.f32.partialorder %v20, 0.0
  %vm222 = vcmp.gt.f32.partialorder %v21, 0.0
  %v223 = vsel %vm215, %v207, -1e+30
  %v224 = vsel %vm216, %v208, -1e+30
  %v225 = vsel %vm217, %v209, -1e+30
  %v226 = vsel %vm218, %v210, -1e+30
  %v227 = vsel %vm219, %v211, -1e+30
  %v228 = vsel %vm220, %v212, -1e+30
  %v229 = vsel %vm221, %v213, -1e+30
  %v230 = vsel %vm222, %v214, -1e+30
  %vm231 = vcmask 130048
  %v232 = vsel %vm231, %v223, -inf
  %233 = vmax.xlane.f32.xlu0 %v232
  %v234 = vpop.xlane.xlu0 %233
  %v235 = vsel %vm231, %v224, -inf
  %236 = vmax.xlane.f32.xlu0 %v235
  %v237 = vpop.xlane.xlu0 %236
  %v238 = vsel %vm231, %v225, -inf
  %239 = vmax.xlane.f32.xlu0 %v238
  %v240 = vpop.xlane.xlu0 %239
  %v241 = vsel %vm231, %v226, -inf
  %242 = vmax.xlane.f32.xlu0 %v241
  %v243 = vpop.xlane.xlu0 %242
  %v244 = vsel %vm231, %v227, -inf
  %245 = vmax.xlane.f32.xlu0 %v244
  %v246 = vpop.xlane.xlu0 %245
  %v247 = vsel %vm231, %v228, -inf
  %248 = vmax.xlane.f32.xlu0 %v247
  %v249 = vpop.xlane.xlu0 %248
  %v250 = vsel %vm231, %v229, -inf
  %251 = vmax.xlane.f32.xlu0 %v250
  %v252 = vpop.xlane.xlu0 %251
  %v253 = vsel %vm231, %v230, -inf
  %254 = vmax.xlane.f32.xlu0 %v253
  %v255 = vpop.xlane.xlu0 %254
  %v256 = vsub.f32 %v223, %v234
  %v257 = vsub.f32 %v224, %v237
  %v258 = vsub.f32 %v225, %v240
  %v259 = vsub.f32 %v226, %v243
  %v260 = vsub.f32 %v227, %v246
  %v261 = vsub.f32 %v228, %v249
  %v262 = vsub.f32 %v229, %v252
  %v263 = vsub.f32 %v230, %v255
  %v264 = vmul.f32 %v256, 1.442695
  %v265 = vpow.pop %v264
  %v266 = vmul.f32 %v257, 1.442695
  %v267 = vpow.pop %v266
  %v268 = vmul.f32 %v258, 1.442695
  %v269 = vpow.pop %v268
  %v270 = vmul.f32 %v259, 1.442695
  %v271 = vpow.pop %v270
  %v272 = vmul.f32 %v260, 1.442695
  %v273 = vpow.pop %v272
  %v274 = vmul.f32 %v261, 1.442695
  %v275 = vpow.pop %v274
  %v276 = vmul.f32 %v262, 1.442695
  %v277 = vpow.pop %v276
  %v278 = vmul.f32 %v263, 1.442695
  %v279 = vpow.pop %v278
  %v280 = vsel %vm231, %v265, 0.0
  %281 = vadd.xlane.f32.xlu0 %v280
  %v282 = vpop.xlane.xlu0 %281
  %v283 = vsel %vm231, %v267, 0.0
  %284 = vadd.xlane.f32.xlu0 %v283
  %v285 = vpop.xlane.xlu0 %284
  %v286 = vsel %vm231, %v269, 0.0
  %287 = vadd.xlane.f32.xlu0 %v286
  %v288 = vpop.xlane.xlu0 %287
  %v289 = vsel %vm231, %v271, 0.0
  %290 = vadd.xlane.f32.xlu0 %v289
  %v291 = vpop.xlane.xlu0 %290
  %v292 = vsel %vm231, %v273, 0.0
  %293 = vadd.xlane.f32.xlu0 %v292
  %v294 = vpop.xlane.xlu0 %293
  %v295 = vsel %vm231, %v275, 0.0
  %296 = vadd.xlane.f32.xlu0 %v295
  %v297 = vpop.xlane.xlu0 %296
  %v298 = vsel %vm231, %v277, 0.0
  %299 = vadd.xlane.f32.xlu0 %v298
  %v300 = vpop.xlane.xlu0 %299
  %v301 = vsel %vm231, %v279, 0.0
  %302 = vadd.xlane.f32.xlu0 %v301
  %v303 = vpop.xlane.xlu0 %302
  %v304 = vrcp.pop %v282
  %v305 = vmul.f32 %v282, %v304
  %v306 = vsub.f32 1.0, %v305
  %v307 = vmul.f32 %v304, %v306
  %v308 = vadd.f32 %v304, %v307
  %vm309 = vweird.f32 %v282
  %vm310 = vweird.f32 %v304
  %vm311 = vmor %vm309, %vm310
  %v312 = vsel %vm311, %v304, %v308
  %v313 = vand.u32 2147483647, %v282
  %vm314 = vcmp.eq.f32.partialorder %v313, 8.507059e+37
  %v315 = vand.u32 %v282, 2147483648
  %v316 = vor.u32 1.1754944e-38, %v315
  %v317 = vsel %vm314, %v316, %v312
  %v318 = vrcp.pop %v285
  %v319 = vmul.f32 %v285, %v318
  %v320 = vsub.f32 1.0, %v319
  %v321 = vmul.f32 %v318, %v320
  %v322 = vadd.f32 %v318, %v321
  %vm323 = vweird.f32 %v285
  %vm324 = vweird.f32 %v318
  %vm325 = vmor %vm323, %vm324
  %v326 = vsel %vm325, %v318, %v322
  %v327 = vand.u32 2147483647, %v285
  %vm328 = vcmp.eq.f32.partialorder %v327, 8.507059e+37
  %v329 = vand.u32 %v285, 2147483648
  %v330 = vor.u32 1.1754944e-38, %v329
  %v331 = vsel %vm328, %v330, %v326
  %v332 = vrcp.pop %v288
  %v333 = vmul.f32 %v288, %v332
  %v334 = vsub.f32 1.0, %v333
  %v335 = vmul.f32 %v332, %v334
  %v336 = vadd.f32 %v332, %v335
  %vm337 = vweird.f32 %v288
  %vm338 = vweird.f32 %v332
  %vm339 = vmor %vm337, %vm338
  %v340 = vsel %vm339, %v332, %v336
  %v341 = vand.u32 2147483647, %v288
  %vm342 = vcmp.eq.f32.partialorder %v341, 8.507059e+37
  %v343 = vand.u32 %v288, 2147483648
  %v344 = vor.u32 1.1754944e-38, %v343
  %v345 = vsel %vm342, %v344, %v340
  %v346 = vrcp.pop %v291
  %v347 = vmul.f32 %v291, %v346
  %v348 = vsub.f32 1.0, %v347
  %v349 = vmul.f32 %v346, %v348
  %v350 = vadd.f32 %v346, %v349
  %vm351 = vweird.f32 %v291
  %vm352 = vweird.f32 %v346
  %vm353 = vmor %vm351, %vm352
  %v354 = vsel %vm353, %v346, %v350
  %v355 = vand.u32 2147483647, %v291
  %vm356 = vcmp.eq.f32.partialorder %v355, 8.507059e+37
  %v357 = vand.u32 %v291, 2147483648
  %v358 = vor.u32 1.1754944e-38, %v357
  %v359 = vsel %vm356, %v358, %v354
  %v360 = vrcp.pop %v294
  %v361 = vmul.f32 %v294, %v360
  %v362 = vsub.f32 1.0, %v361
  %v363 = vmul.f32 %v360, %v362
  %v364 = vadd.f32 %v360, %v363
  %vm365 = vweird.f32 %v294
  %vm366 = vweird.f32 %v360
  %vm367 = vmor %vm365, %vm366
  %v368 = vsel %vm367, %v360, %v364
  %v369 = vand.u32 2147483647, %v294
  %vm370 = vcmp.eq.f32.partialorder %v369, 8.507059e+37
  %v371 = vand.u32 %v294, 2147483648
  %v372 = vor.u32 1.1754944e-38, %v371
  %v373 = vsel %vm370, %v372, %v368
  %v374 = vrcp.pop %v297
  %v375 = vmul.f32 %v297, %v374
  %v376 = vsub.f32 1.0, %v375
  %v377 = vmul.f32 %v374, %v376
  %v378 = vadd.f32 %v374, %v377
  %vm379 = vweird.f32 %v297
  %vm380 = vweird.f32 %v374
  %vm381 = vmor %vm379, %vm380
  %v382 = vsel %vm381, %v374, %v378
  %v383 = vand.u32 2147483647, %v297
  %vm384 = vcmp.eq.f32.partialorder %v383, 8.507059e+37
  %v385 = vand.u32 %v297, 2147483648
  %v386 = vor.u32 1.1754944e-38, %v385
  %v387 = vsel %vm384, %v386, %v382
  %v388 = vrcp.pop %v300
  %v389 = vmul.f32 %v300, %v388
  %v390 = vsub.f32 1.0, %v389
  %v391 = vmul.f32 %v388, %v390
  %v392 = vadd.f32 %v388, %v391
  %vm393 = vweird.f32 %v300
  %vm394 = vweird.f32 %v388
  %vm395 = vmor %vm393, %vm394
  %v396 = vsel %vm395, %v388, %v392
  %v397 = vand.u32 2147483647, %v300
  %vm398 = vcmp.eq.f32.partialorder %v397, 8.507059e+37
  %v399 = vand.u32 %v300, 2147483648
  %v400 = vor.u32 1.1754944e-38, %v399
  %v401 = vsel %vm398, %v400, %v396
  %v402 = vrcp.pop %v303
  %v403 = vmul.f32 %v303, %v402
  %v404 = vsub.f32 1.0, %v403
  %v405 = vmul.f32 %v402, %v404
  %v406 = vadd.f32 %v402, %v405
  %vm407 = vweird.f32 %v303
  %vm408 = vweird.f32 %v402
  %vm409 = vmor %vm407, %vm408
  %v410 = vsel %vm409, %v402, %v406
  %v411 = vand.u32 2147483647, %v303
  %vm412 = vcmp.eq.f32.partialorder %v411, 8.507059e+37
  %v413 = vand.u32 %v303, 2147483648
  %v414 = vor.u32 1.1754944e-38, %v413
  %v415 = vsel %vm412, %v414, %v410
  %v416 = vmul.f32 %v265, %v317
  %v417 = vmul.f32 %v267, %v331
  %v418 = vmul.f32 %v269, %v345
  %v419 = vmul.f32 %v271, %v359
  %v420 = vmul.f32 %v273, %v373
  %v421 = vmul.f32 %v275, %v387
  %v422 = vmul.f32 %v277, %v401
  %v423 = vmul.f32 %v279, %v415
  %v424 = vld [vmem:[%s2 + $0x108] sm:$0xff]
  %v425 = vld [vmem:[%s2 + $0x110] sm:$0xff]
  %v426 = vld [vmem:[%s2 + $0x118] sm:$0xff]
  %v427 = vld [vmem:[%s2 + $0x120] sm:$0xff]
  %v428 = vld [vmem:[%s2 + $0x128] sm:$0xff]
  %v429 = vld [vmem:[%s2 + $0x130] sm:$0xff]
  %v430 = vld [vmem:[%s2 + $0x138] sm:$0xff]
  %v431 = vld [vmem:[%s2 + $0x140] sm:$0xff]
  %v432 = vld [vmem:[%s2 + $0x148] sm:$0xff]
  %v433 = vld [vmem:[%s2 + $0x150] sm:$0xff]
  %v434 = vld [vmem:[%s2 + $0x158] sm:$0xff]
  %v435 = vld [vmem:[%s2 + $0x160] sm:$0xff]
  %v436 = vld [vmem:[%s2 + $0x168] sm:$0xff]
  %v437 = vld [vmem:[%s2 + $0x170] sm:$0xff]
  %v438 = vld [vmem:[%s2 + $0x178] sm:$0xff]
  %v439 = vld [vmem:[%s2 + $0x180] sm:$0xff]
  %440 = vmatpush.msra.mxu0 %v439
  %441 = vmatpush.msra.mxu0 %v438
  %442 = vmatpush.msra.mxu0 %v437
  %443 = vmatpush.msra.mxu0 %v436
  %444 = vmatpush.msra.mxu0 %v435
  %445 = vmatpush.msra.mxu0 %v434
  %446 = vmatpush.msra.mxu0 %v433
  %447 = vmatpush.msra.mxu0 %v432
  %448 = vmatpush.msra.mxu0 %v431
  %449 = vmatpush.msra.mxu0 %v430
  %450 = vmatpush.msra.mxu0 %v429
  %451 = vmatpush.msra.mxu0 %v428
  %452 = vmatpush.msra.mxu0 %v427
  %453 = vmatpush.msra.mxu0 %v426
  %454 = vmatpush.msra.mxu0 %v425
  %455 = vmatpush.msra.mxu0 %v424
  %456 = vmatmul.f32.gmra.mxu0 %v97
  %v457 = vpop.f32.mrf.mxu0
  %v458 = vadd.f32 0.0, %v457
  %459 = vmatmul.f32.gmra.mxu0 %v100
  %v460 = vpop.f32.mrf.mxu0
  %v461 = vadd.f32 0.0, %v460
  %462 = vdwg.mxu0
  %v464 = vsel %vm231, %v416, 0
  %v467 = vsel %vm231, %v417, 0
  %v470 = vsel %vm231, %v418, 0
  %v473 = vsel %vm231, %v419, 0
  %v476 = vsel %vm231, %v420, 0
  %v479 = vsel %vm231, %v421, 0
  %v482 = vsel %vm231, %v422, 0
  %v485 = vsel %vm231, %v423, 0
  %487 = vmatpush.msra.mxu0 0.0
  %488 = vmatpush.msra.mxu0 0.0
  %489 = vmatpush.msra.mxu0 0.0
  %490 = vmatpush.msra.mxu0 0.0
  %491 = vmatpush.msra.mxu0 0.0
  %492 = vmatpush.msra.mxu0 0.0
  %493 = vmatpush.msra.mxu0 0.0
  %494 = vmatpush.msra.mxu0 0.0
  %495 = vmatpush.msra.mxu0 0.0
  %496 = vmatpush.msra.mxu0 0.0
  %497 = vmatpush.msra.mxu0 0.0
  %498 = vmatpush.msra.mxu0 0.0
  %499 = vmatpush.msra.mxu0 0.0
  %500 = vmatpush.msra.mxu0 0.0
  %501 = vmatpush.msra.mxu0 %v461
  %502 = vmatpush.msra.mxu0 %v458
  %503 = vmatmul.f32.gmra.mxu0 %v464
  %v504 = vpop.f32.mrf.mxu0
  %v505 = vadd.f32 0.0, %v504
  %506 = vmatmul.f32.gmra.mxu0 %v467
  %v507 = vpop.f32.mrf.mxu0
  %v508 = vadd.f32 0.0, %v507
  %509 = vmatmul.f32.gmra.mxu0 %v470
  %v510 = vpop.f32.mrf.mxu0
  %v511 = vadd.f32 0.0, %v510
  %512 = vmatmul.f32.gmra.mxu0 %v473
  %v513 = vpop.f32.mrf.mxu0
  %v514 = vadd.f32 0.0, %v513
  %515 = vmatmul.f32.gmra.mxu0 %v476
  %v516 = vpop.f32.mrf.mxu0
  %v517 = vadd.f32 0.0, %v516
  %518 = vmatmul.f32.gmra.mxu0 %v479
  %v519 = vpop.f32.mrf.mxu0
  %v520 = vadd.f32 0.0, %v519
  %521 = vmatmul.f32.gmra.mxu0 %v482
  %v522 = vpop.f32.mrf.mxu0
  %v523 = vadd.f32 0.0, %v522
  %524 = vmatmul.f32.gmra.mxu0 %v485
  %v525 = vpop.f32.mrf.mxu0
  %v526 = vadd.f32 0.0, %v525
  %527 = vdwg.mxu0
  %v528 = vld [vmem:[%s2 + $0x188] sm:$0x1]
  %v529 = vperm.slane %v528, 0
  %v530 = vadd.f32 %v529, %v505
  %v531 = vadd.f32 %v529, %v508
  %534 = vrot.lane.b32.xlu0 %v511, 96
  %v535 = vpop.permute.xlu0 %534
  %536 = vrot.lane.b32.xlu0 %v514, 96
  %v537 = vpop.permute.xlu0 %536
  %v540 = vadd.f32 %v530, %v535
  %v541 = vadd.f32 %v531, %v537
  %544 = vrot.lane.b32.xlu0 %v517, 64
  %v545 = vpop.permute.xlu0 %544
  %546 = vrot.lane.b32.xlu0 %v520, 64
  %v547 = vpop.permute.xlu0 %546
  %v550 = vadd.f32 %v540, %v545
  %v551 = vadd.f32 %v541, %v547
  %554 = vrot.lane.b32.xlu0 %v523, 32
  %v555 = vpop.permute.xlu0 %554
  %556 = vrot.lane.b32.xlu0 %v526, 32
  %v557 = vpop.permute.xlu0 %556
  %v560 = vadd.f32 %v550, %v555
  %v561 = vadd.f32 %v551, %v557
  %v562 = vld [vmem:[%s2 + $0x190] sm:$0x1]
  %v563 = vperm.slane %v562, 0
  %v564 = vmul.f32 %v560, %v563
  %v565 = vmul.f32 %v561, %v563
  %v566 = vsel %vm72, %v564, 0.0
  %567 = vadd.xlane.f32.xlu0 %v566
  %v568 = vpop.xlane.xlu0 %567
  %v569 = vsel %vm72, %v565, 0.0
  %570 = vadd.xlane.f32.xlu0 %v569
  %v571 = vpop.xlane.xlu0 %570
  %v572 = vld [vmem:[%s2 + $0x198] sm:$0x1]
  %v574 = vsel %vm72, %v572, 0
  %v577 = vsel %vm72, %v560, 0
  %v580 = vsel %vm72, %v561, 0
  %582 = vmatpush.xpose.msra.mxu0 0.0
  %583 = vmatpush.xpose.msra.mxu0 0.0
  %584 = vmatpush.xpose.msra.mxu0 0.0
  %585 = vmatpush.xpose.msra.mxu0 0.0
  %586 = vmatpush.xpose.msra.mxu0 0.0
  %587 = vmatpush.xpose.msra.mxu0 0.0
  %588 = vmatpush.xpose.msra.mxu0 0.0
  %589 = vmatpush.xpose.msra.mxu0 0.0
  %590 = vmatpush.xpose.msra.mxu0 0.0
  %591 = vmatpush.xpose.msra.mxu0 0.0
  %592 = vmatpush.xpose.msra.mxu0 0.0
  %593 = vmatpush.xpose.msra.mxu0 0.0
  %594 = vmatpush.xpose.msra.mxu0 0.0
  %595 = vmatpush.xpose.msra.mxu0 0.0
  %596 = vmatpush.xpose.msra.mxu0 %v580
  %597 = vmatpush.xpose.msra.mxu0 %v577
  %598 = vmatmul.f32.gmra.mxu0 %v574
  %v599 = vpop.f32.mrf.mxu0
  %v600 = vadd.f32 0.0, %v599
  %601 = vdwg.mxu0
  %v602 = vperm.slane %v600, 0
  %v603 = vadd.f32 %v568, %v602
  %v604 = vadd.f32 %v571, %v602
  %vm605 = vcmp.ge.f32.partialorder %v603, 0.0
  %vm606 = vcmp.ge.f32.partialorder %v604, 0.0
  %v607 = vmul.f32 %v603, 0.2
  %v608 = vmul.f32 %v604, 0.2
  %v609 = vsel %vm605, %v603, %v607
  %v610 = vsel %vm606, %v604, %v608
  %v611 = vsel %vm215, %v609, -1e+30
  %v612 = vsel %vm216, %v610, -1e+30
  %v613 = vsel %vm231, %v611, -inf
  %614 = vmax.xlane.f32.xlu0 %v613
  %v615 = vpop.xlane.xlu0 %614
  %v616 = vsel %vm231, %v612, -inf
  %617 = vmax.xlane.f32.xlu0 %v616
  %v618 = vpop.xlane.xlu0 %617
  %v619 = vsub.f32 %v611, %v615
  %v620 = vsub.f32 %v612, %v618
  %v621 = vmul.f32 %v619, 1.442695
  %v622 = vpow.pop %v621
  %v623 = vmul.f32 %v620, 1.442695
  %v624 = vpow.pop %v623
  %v625 = vsel %vm231, %v622, 0.0
  %626 = vadd.xlane.f32.xlu0 %v625
  %v627 = vpop.xlane.xlu0 %626
  %v628 = vsel %vm231, %v624, 0.0
  %629 = vadd.xlane.f32.xlu0 %v628
  %v630 = vpop.xlane.xlu0 %629
  %v631 = vrcp.pop %v627
  %v632 = vmul.f32 %v627, %v631
  %v633 = vsub.f32 1.0, %v632
  %v634 = vmul.f32 %v631, %v633
  %v635 = vadd.f32 %v631, %v634
  %vm636 = vweird.f32 %v627
  %vm637 = vweird.f32 %v631
  %vm638 = vmor %vm636, %vm637
  %v639 = vsel %vm638, %v631, %v635
  %v640 = vand.u32 2147483647, %v627
  %vm641 = vcmp.eq.f32.partialorder %v640, 8.507059e+37
  %v642 = vand.u32 %v627, 2147483648
  %v643 = vor.u32 1.1754944e-38, %v642
  %v644 = vsel %vm641, %v643, %v639
  %v645 = vrcp.pop %v630
  %v646 = vmul.f32 %v630, %v645
  %v647 = vsub.f32 1.0, %v646
  %v648 = vmul.f32 %v645, %v647
  %v649 = vadd.f32 %v645, %v648
  %vm650 = vweird.f32 %v630
  %vm651 = vweird.f32 %v645
  %vm652 = vmor %vm650, %vm651
  %v653 = vsel %vm652, %v645, %v649
  %v654 = vand.u32 2147483647, %v630
  %vm655 = vcmp.eq.f32.partialorder %v654, 8.507059e+37
  %v656 = vand.u32 %v630, 2147483648
  %v657 = vor.u32 1.1754944e-38, %v656
  %v658 = vsel %vm655, %v657, %v653
  %v659 = vmul.f32 %v622, %v644
  %v660 = vmul.f32 %v624, %v658
  %v661 = vld [vmem:[%s2 + $0x1a0] sm:$0x1]
  %v662 = vperm.slane %v661, 0
  %v664 = vsel %vm231, %v659, 0
  %v667 = vsel %vm231, %v660, 0
  %669 = vmatpush.msra.mxu0 0.0
  %670 = vmatpush.msra.mxu0 0.0
  %671 = vmatpush.msra.mxu0 0.0
  %672 = vmatpush.msra.mxu0 0.0
  %673 = vmatpush.msra.mxu0 0.0
  %674 = vmatpush.msra.mxu0 0.0
  %675 = vmatpush.msra.mxu0 0.0
  %676 = vmatpush.msra.mxu0 0.0
  %677 = vmatpush.msra.mxu0 0.0
  %678 = vmatpush.msra.mxu0 0.0
  %679 = vmatpush.msra.mxu0 0.0
  %680 = vmatpush.msra.mxu0 0.0
  %681 = vmatpush.msra.mxu0 0.0
  %682 = vmatpush.msra.mxu0 0.0
  %683 = vmatpush.msra.mxu0 %v561
  %684 = vmatpush.msra.mxu0 %v560
  %685 = vmatmul.f32.gmra.mxu0 %v664
  %v686 = vpop.f32.mrf.mxu0
  %v687 = vadd.f32 %v662, %v686
  %688 = vmatmul.f32.gmra.mxu0 %v667
  %v689 = vpop.f32.mrf.mxu0
  %v690 = vadd.f32 %v662, %v689
  %691 = vdwg.mxu0
  %v692 = vld [vmem:[%s2 + $0x1a8] sm:$0x1]
  %v693 = vperm.slane %v692, 0
  %v694 = vmul.f32 %v687, %v693
  %v695 = vmul.f32 %v690, %v693
  %v696 = vsel %vm72, %v694, 0.0
  %697 = vadd.xlane.f32.xlu0 %v696
  %v698 = vpop.xlane.xlu0 %697
  %v699 = vsel %vm72, %v695, 0.0
  %700 = vadd.xlane.f32.xlu0 %v699
  %v701 = vpop.xlane.xlu0 %700
  %v702 = vld [vmem:[%s2 + $0x1b0] sm:$0x1]
  %v703 = vperm.slane %v702, 0
  %v704 = vadd.f32 %v698, %v703
  %v705 = vadd.f32 %v701, %v703
  %v706 = vsub.f32 0.0, %v704
  %v707 = vsub.f32 0.0, %v705
  %v708 = vmul.f32 %v706, 1.442695
  %v709 = vpow.pop %v708
  %v710 = vmul.f32 %v707, 1.442695
  %v711 = vpow.pop %v710
  %v712 = vadd.f32 %v709, 1.0
  %v713 = vadd.f32 %v711, 1.0
  %v714 = vrcp.pop %v712
  %v715 = vmul.f32 %v712, %v714
  %v716 = vsub.f32 1.0, %v715
  %v717 = vmul.f32 %v714, %v716
  %v718 = vadd.f32 %v714, %v717
  %vm719 = vweird.f32 %v712
  %vm720 = vweird.f32 %v714
  %vm721 = vmor %vm719, %vm720
  %v722 = vsel %vm721, %v714, %v718
  %v723 = vand.u32 2147483647, %v712
  %vm724 = vcmp.eq.f32.partialorder %v723, 8.507059e+37
  %v725 = vand.u32 %v712, 2147483648
  %v726 = vor.u32 1.1754944e-38, %v725
  %v727 = vsel %vm724, %v726, %v722
  %v728 = vrcp.pop %v713
  %v729 = vmul.f32 %v713, %v728
  %v730 = vsub.f32 1.0, %v729
  %v731 = vmul.f32 %v728, %v730
  %v732 = vadd.f32 %v728, %v731
  %vm733 = vweird.f32 %v713
  %vm734 = vweird.f32 %v728
  %vm735 = vmor %vm733, %vm734
  %v736 = vsel %vm735, %v728, %v732
  %v737 = vand.u32 2147483647, %v713
  %vm738 = vcmp.eq.f32.partialorder %v737, 8.507059e+37
  %v739 = vand.u32 %v713, 2147483648
  %v740 = vor.u32 1.1754944e-38, %v739
  %v741 = vsel %vm738, %v740, %v736
  %743 = vset.pattern.permute.xlu0 0
  %744 = vperm.xlu0 %743, %v727
  %v745 = vpop.permute.xlu0 %744
  %748 = vset.pattern.permute.xlu0 0
  %749 = vperm.xlu0 %748, %v741
  %v750 = vpop.permute.xlu0 %749
  %v752 = vmul.f32 %v687, %v745
  %v753 = vmul.f32 %v690, %v750
  %v754 = vsel %vm72, %v752, 0.0
  %v755 = vsel %vm72, %v753, 0.0
  %v756 = vadd.f32 %v754, %v755
  %v757 = vrot.slane %v756, 4
  %v758 = vadd.f32 %v756, %v757
  %v759 = vrot.slane %v758, 2
  %v760 = vadd.f32 %v758, %v759
  %v761 = vrot.slane %v760, 1
  %v762 = vadd.f32 %v760, %v761
  %v763 = vld [vmem:[%s2 + $0x1b8] sm:$0xff]
  %v764 = vld [vmem:[%s2 + $0x1c0] sm:$0xff]
  %v765 = vld [vmem:[%s2 + $0x1c8] sm:$0xff]
  %v766 = vld [vmem:[%s2 + $0x1d0] sm:$0xff]
  %v767 = vld [vmem:[%s2 + $0x1d8] sm:$0x1]
  %v768 = vperm.slane %v767, 0
  %v770 = vsel %vm72, %v687, 0
  %v773 = vsel %vm72, %v690, 0
  %775 = vmatpush.msra.mxu0 0.0
  %776 = vmatpush.msra.mxu0 0.0
  %777 = vmatpush.msra.mxu0 0.0
  %778 = vmatpush.msra.mxu0 0.0
  %779 = vmatpush.msra.mxu0 0.0
  %780 = vmatpush.msra.mxu0 0.0
  %781 = vmatpush.msra.mxu0 0.0
  %782 = vmatpush.msra.mxu0 0.0
  %783 = vmatpush.msra.mxu0 0.0
  %784 = vmatpush.msra.mxu0 0.0
  %785 = vmatpush.msra.mxu0 0.0
  %786 = vmatpush.msra.mxu0 0.0
  %787 = vmatpush.msra.mxu0 %v766
  %788 = vmatpush.msra.mxu0 %v765
  %789 = vmatpush.msra.mxu0 %v764
  %790 = vmatpush.msra.mxu0 %v763
  %791 = vmatmul.f32.gmra.mxu0 %v770
  %v792 = vpop.f32.mrf.mxu0
  %v793 = vadd.f32 %v768, %v792
  %794 = vmatmul.f32.gmra.mxu0 %v773
  %v795 = vpop.f32.mrf.mxu0
  %v796 = vadd.f32 %v768, %v795
  %797 = vdwg.mxu0
  %v798 = vmax.f32 %v793, 0.0
  %v799 = vmax.f32 %v796, 0.0
  %v800 = vld [vmem:[%s2 + $0x1e0] sm:$0xff]
  %v801 = vld [vmem:[%s2 + $0x1e8] sm:$0xff]
  %v802 = vld [vmem:[%s2 + $0x1f0] sm:$0xff]
  %v803 = vld [vmem:[%s2 + $0x1f8] sm:$0xff]
  %v804 = vld [vmem:[%s2 + $0x200] sm:$0x1]
  %v805 = vperm.slane %v804, 0
  %v807 = vsel %vm72, %v798, 0
  %v810 = vsel %vm72, %v799, 0
  %812 = vmatpush.msra.mxu0 0.0
  %813 = vmatpush.msra.mxu0 0.0
  %814 = vmatpush.msra.mxu0 0.0
  %815 = vmatpush.msra.mxu0 0.0
  %816 = vmatpush.msra.mxu0 0.0
  %817 = vmatpush.msra.mxu0 0.0
  %818 = vmatpush.msra.mxu0 0.0
  %819 = vmatpush.msra.mxu0 0.0
  %820 = vmatpush.msra.mxu0 0.0
  %821 = vmatpush.msra.mxu0 0.0
  %822 = vmatpush.msra.mxu0 0.0
  %823 = vmatpush.msra.mxu0 0.0
  %824 = vmatpush.msra.mxu0 %v803
  %825 = vmatpush.msra.mxu0 %v802
  %826 = vmatpush.msra.mxu0 %v801
  %827 = vmatpush.msra.mxu0 %v800
  %828 = vmatmul.f32.gmra.mxu0 %v807
  %v829 = vpop.f32.mrf.mxu0
  %v830 = vadd.f32 %v805, %v829
  %831 = vmatmul.f32.gmra.mxu0 %v810
  %v832 = vpop.f32.mrf.mxu0
  %v833 = vadd.f32 %v805, %v832
  %834 = vdwg.mxu0
  %835 = vst [vmem:[%s3] sm:$0xff] %v830
  %836 = vst [vmem:[%s3 + $0x8] sm:$0xff] %v833
  %v837 = vld [vmem:[%s2 + $0x208] sm:$0xff]
  %v838 = vld [vmem:[%s2 + $0x210] sm:$0xff]
  %v839 = vld [vmem:[%s2 + $0x218] sm:$0xff]
  %v840 = vld [vmem:[%s2 + $0x220] sm:$0xff]
  %v841 = vld [vmem:[%s2 + $0x228] sm:$0x1]
  %v842 = vperm.slane %v841, 0
  %v844 = vsel %vm72, %v762, 0
  %846 = vmatpush.msra.mxu0 0.0
  %847 = vmatpush.msra.mxu0 0.0
  %848 = vmatpush.msra.mxu0 0.0
  %849 = vmatpush.msra.mxu0 0.0
  %850 = vmatpush.msra.mxu0 0.0
  %851 = vmatpush.msra.mxu0 0.0
  %852 = vmatpush.msra.mxu0 0.0
  %853 = vmatpush.msra.mxu0 0.0
  %854 = vmatpush.msra.mxu0 0.0
  %855 = vmatpush.msra.mxu0 0.0
  %856 = vmatpush.msra.mxu0 0.0
  %857 = vmatpush.msra.mxu0 0.0
  %858 = vmatpush.msra.mxu0 %v840
  %859 = vmatpush.msra.mxu0 %v839
  %860 = vmatpush.msra.mxu0 %v838
  %861 = vmatpush.msra.mxu0 %v837
  %862 = vmatmul.f32.gmra.mxu0 %v844
  %v863 = vpop.f32.mrf.mxu0
  %v864 = vadd.f32 %v842, %v863
  %865 = vdwg.mxu0
  %v866 = vmax.f32 %v864, 0.0
  %v867 = vld [vmem:[%s2 + $0x230] sm:$0xff]
  %v868 = vld [vmem:[%s2 + $0x238] sm:$0xff]
  %v869 = vld [vmem:[%s2 + $0x240] sm:$0xff]
  %v870 = vld [vmem:[%s2 + $0x248] sm:$0xff]
  %v871 = vld [vmem:[%s2 + $0x250] sm:$0x1]
  %v872 = vperm.slane %v871, 0
  %v874 = vsel %vm72, %v866, 0
  %876 = vmatpush.msra.mxu0 0.0
  %877 = vmatpush.msra.mxu0 0.0
  %878 = vmatpush.msra.mxu0 0.0
  %879 = vmatpush.msra.mxu0 0.0
  %880 = vmatpush.msra.mxu0 0.0
  %881 = vmatpush.msra.mxu0 0.0
  %882 = vmatpush.msra.mxu0 0.0
  %883 = vmatpush.msra.mxu0 0.0
  %884 = vmatpush.msra.mxu0 0.0
  %885 = vmatpush.msra.mxu0 0.0
  %886 = vmatpush.msra.mxu0 0.0
  %887 = vmatpush.msra.mxu0 0.0
  %888 = vmatpush.msra.mxu0 %v870
  %889 = vmatpush.msra.mxu0 %v869
  %890 = vmatpush.msra.mxu0 %v868
  %891 = vmatpush.msra.mxu0 %v867
  %892 = vmatmul.f32.gmra.mxu0 %v874
  %v893 = vpop.f32.mrf.mxu0
  %v894 = vadd.f32 %v872, %v893
  %895 = vdwg.mxu0
  %896 = vst [vmem:[%s3 + $0x10] sm:$0xff] %v894
  // Predicated region
  $region14: #{multitask_gat_forward.1} parent=0 // pred_check
    _
  $region15: #{multitask_gat_forward.1} parent=0 // pred_check_branch
    %898 = sbr.rel (0) target = $region17
  $region16: #{multitask_gat_forward.1} parent=0 // pred_region
    _
  $region17: #{multitask_gat_forward.1} parent=0 // pred_fallthru
    _
  // Predicated region
  $region18: #{multitask_gat_forward.1} parent=0 // pred_check
    _
  $region19: #{multitask_gat_forward.1} parent=0 // pred_check_branch
    %900 = sbr.rel (0) target = $region21
  $region20: #{multitask_gat_forward.1} parent=0 // pred_region
    _
  $region21: #{multitask_gat_forward.1} parent=0 // pred_fallthru
    _

</llo_original>
